<compile_context>
chip_gen: v5e
topology: v5e:2x2
jax: 0.10.0
libtpu: 0.0.40
codegen_flags: <defaults>
</compile_context>

<pallas_src>
import jax
import jax.numpy as jnp
from jax.experimental import pallas as pl
from jax.experimental.pallas import tpu as pltpu

NEG_SLOPE = 0.01       # nn.LeakyReLU default
TILE_B_MAX = 512       # rows per grid step (few-MiB VMEM even on v7x's 64 MiB)
NEG_BIG = -1e30        # bias for padded logit columns -> exp() underflows to 0


def _round_up(x, m):
    return ((x + m - 1) // m) * m


def _leaky_relu(x):
    return jnp.where(x > 0, x, NEG_SLOPE * x)


def actor_kernel(x_ref, w1_ref, b1_ref, w2_ref, b2_ref, w3_ref, b3_ref, out_ref):
    x = x_ref[...]                                    # (tile_b, in_dim) f32

    # Layer 1: Linear + LeakyReLU (MXU matmul, f32 accumulation)
    h1 = jnp.dot(x, w1_ref[...], preferred_element_type=jnp.float32) + b1_ref[...]
    h1 = _leaky_relu(h1)

    # Layer 2: Linear + LeakyReLU
    h2 = jnp.dot(h1, w2_ref[...], preferred_element_type=jnp.float32) + b2_ref[...]
    h2 = _leaky_relu(h2)

    # Layer 3: Linear -> logits (lane-dense, padded columns carry -1e30 bias)
    logits = jnp.dot(h2, w3_ref[...], preferred_element_type=jnp.float32) + b3_ref[...]

    # Numerically stable softmax; padded columns give exp(...) == 0 exactly.
    m = jnp.max(logits, axis=-1, keepdims=True)
    e = jnp.exp(logits - m)
    inv = pl.reciprocal(jnp.sum(e, axis=-1, keepdims=True), approx=True)  # EUP
    out_ref[...] = (e * inv).astype(out_ref.dtype)


def actor_forward(x, params):
    """x: (B, in_dim) float32. params: dict of w1,b1,w2,b2,w3,b3 (unpadded)."""
    w1, b1, w2, b2 = params["w1"], params["b1"], params["w2"], params["b2"]
    w3, b3 = params["w3"], params["b3"]

    B, in_dim = x.shape
    hidden = w1.shape[1]
    out_dim = w3.shape[1]

    # ---- lane-dense output padding (out_dim -> multiple of 128) ----
    out_pad = _round_up(out_dim, 128)
    if out_pad != out_dim:
        w3p = jnp.pad(w3, ((0, 0), (0, out_pad - out_dim)))
        b3p = jnp.pad(b3, ((0, 0), (0, out_pad - out_dim)),
                      constant_values=NEG_BIG)
    else:
        w3p, b3p = w3, b3

    # ---- batch tiling (pad rows to a multiple of the tile) ----
    tile_b = min(TILE_B_MAX, _round_up(B, 8))
    b_pad = _round_up(B, tile_b)
    if b_pad != B:
        x = jnp.pad(x, ((0, b_pad - B), (0, 0)))
    n_steps = b_pad // tile_b

    const_spec = lambda shape: pl.BlockSpec(shape, lambda i: (0,) * len(shape))

    out = pl.pallas_call(
        actor_kernel,
        out_shape=jax.ShapeDtypeStruct((b_pad, out_pad), jnp.float32),
        grid=(n_steps,),
        in_specs=[
            pl.BlockSpec((tile_b, in_dim), lambda i: (i, 0)),   # x: batch-tiled
            const_spec((in_dim, hidden)),                        # w1 (resident)
            const_spec((1, hidden)),                             # b1
            const_spec((hidden, hidden)),                        # w2
            const_spec((1, hidden)),                             # b2
            const_spec((hidden, out_pad)),                       # w3 (padded)
            const_spec((1, out_pad)),                            # b3 (padded)
        ],
        out_specs=pl.BlockSpec((tile_b, out_pad), lambda i: (i, 0)),
        compiler_params=pltpu.CompilerParams(
            dimension_semantics=("parallel",),   # shards batch over 2 TCs on v7x
        ),
    )(x, w1, b1, w2, b2, w3p, b3p)

    return out[:B, :out_dim]


def init_params(key, in_dim, out_dim, hidden_dim=32):
    """Deterministic synthetic init (shapes match nn.Linear layers of Actor)."""
    ks = jax.random.split(key, 6)

    def lin(kw, kb, fan_in, fan_out):
        bound = 1.0 / jnp.sqrt(fan_in)
        w = jax.random.uniform(kw, (fan_in, fan_out), jnp.float32, -bound, bound)
        b = jax.random.uniform(kb, (1, fan_out), jnp.float32, -bound, bound)
        return w, b

    w1, b1 = lin(ks[0], ks[1], in_dim, hidden_dim)
    w2, b2 = lin(ks[2], ks[3], hidden_dim, hidden_dim)
    w3, b3 = lin(ks[4], ks[5], hidden_dim, out_dim)
    return {"w1": w1, "b1": b1, "w2": w2, "b2": b2, "w3": w3, "b3": b3}


def actor_reference(x, p):
    h1 = _leaky_relu(x @ p["w1"] + p["b1"])
    h2 = _leaky_relu(h1 @ p["w2"] + p["b2"])
    logits = h2 @ p["w3"] + p["b3"]
    return jax.nn.softmax(logits, axis=-1)


if __name__ == "__main__":
    batch, in_dim, hidden_dim, out_dim = 8, 16, 32, 8

    key = jax.random.PRNGKey(0)
    k_x, k_p = jax.random.split(key)
    x = jax.random.normal(k_x, (batch, in_dim), jnp.float32)
    params = init_params(k_p, in_dim, out_dim, hidden_dim)

    pol = actor_forward(x, params)
    pol = jax.block_until_ready(pol)

    ref = actor_reference(x, params)
    assert pol.shape == (batch, out_dim), f"bad shape {pol.shape}"
    # approx reciprocal on the EUP -> relax tolerance vs. exact-divide reference
    assert jnp.allclose(pol, ref, atol=5e-3, rtol=5e-3), "mismatch vs reference"
    assert jnp.allclose(jnp.sum(pol, axis=-1), 1.0, atol=5e-3), \
        "softmax rows must sum to ~1"

    print("KERNEL_OK")
</pallas_src>

<mosaic_0001>
module attributes {stable_mosaic.version = 11 : i64} {
  func.func @actor_kernel(%arg0: i32, %arg1: memref<8x16xf32, #tpu.memory_space<vmem>>, %arg2: memref<16x32xf32, #tpu.memory_space<vmem>>, %arg3: memref<1x32xf32, #tpu.memory_space<vmem>>, %arg4: memref<32x32xf32, #tpu.memory_space<vmem>>, %arg5: memref<1x32xf32, #tpu.memory_space<vmem>>, %arg6: memref<32x128xf32, #tpu.memory_space<vmem>>, %arg7: memref<1x128xf32, #tpu.memory_space<vmem>>, %arg8: memref<8x128xf32, #tpu.memory_space<vmem>>) attributes {dimension_semantics = [#tpu.dimension_semantics<parallel>], iteration_bounds = array<i64: 1>, scalar_prefetch = 0 : i64, scratch_operands = 0 : i64, tpu.core_type = #tpu.core_type<tc>, window_params = [{transform_indices = @transform_0, window_bounds = array<i64: 8, 16>}, {pipeline_mode = #tpu.pipeline_mode<synchronous>, transform_indices = @transform_1, window_bounds = array<i64: 16, 32>}, {pipeline_mode = #tpu.pipeline_mode<synchronous>, transform_indices = @transform_2, window_bounds = array<i64: 1, 32>}, {pipeline_mode = #tpu.pipeline_mode<synchronous>, transform_indices = @transform_3, window_bounds = array<i64: 32, 32>}, {pipeline_mode = #tpu.pipeline_mode<synchronous>, transform_indices = @transform_4, window_bounds = array<i64: 1, 32>}, {pipeline_mode = #tpu.pipeline_mode<synchronous>, transform_indices = @transform_5, window_bounds = array<i64: 32, 128>}, {pipeline_mode = #tpu.pipeline_mode<synchronous>, transform_indices = @transform_6, window_bounds = array<i64: 1, 128>}, {transform_indices = @transform_7, window_bounds = array<i64: 8, 128>}]} {
    %c0 = arith.constant 0 : index
    %c0_0 = arith.constant 0 : index
    %0 = vector.load %arg1[%c0, %c0_0] : memref<8x16xf32, #tpu.memory_space<vmem>>, vector<8x16xf32>
    %c0_1 = arith.constant 0 : index
    %c0_2 = arith.constant 0 : index
    %1 = vector.load %arg2[%c0_1, %c0_2] : memref<16x32xf32, #tpu.memory_space<vmem>>, vector<16x32xf32>
    %cst = arith.constant dense<0.000000e+00> : vector<8x32xf32>
    %2 = tpu.matmul %0, %1, %cst {dimension_numbers = #tpu.dot_dimension_numbers<[1], [0], [0], [1], [0, 0, 1, 1], [], []>} : vector<8x16xf32>, vector<16x32xf32>, vector<8x32xf32> -> vector<8x32xf32>
    %c0_3 = arith.constant 0 : index
    %c0_4 = arith.constant 0 : index
    %3 = vector.load %arg3[%c0_3, %c0_4] : memref<1x32xf32, #tpu.memory_space<vmem>>, vector<1x32xf32>
    %4 = vector.broadcast %3 : vector<1x32xf32> to vector<8x32xf32>
    %5 = arith.addf %2, %4 : vector<8x32xf32>
    %cst_5 = arith.constant 0.000000e+00 : f32
    %6 = vector.broadcast %cst_5 : f32 to vector<8x32xf32>
    %7 = arith.cmpf ogt, %5, %6 : vector<8x32xf32>
    %cst_6 = arith.constant 0.00999999977 : f32
    %8 = vector.broadcast %cst_6 : f32 to vector<8x32xf32>
    %9 = arith.mulf %8, %5 : vector<8x32xf32>
    %10 = arith.select %7, %5, %9 : vector<8x32xi1>, vector<8x32xf32>
    %c0_7 = arith.constant 0 : index
    %c0_8 = arith.constant 0 : index
    %11 = vector.load %arg4[%c0_7, %c0_8] : memref<32x32xf32, #tpu.memory_space<vmem>>, vector<32x32xf32>
    %cst_9 = arith.constant dense<0.000000e+00> : vector<8x32xf32>
    %12 = tpu.matmul %10, %11, %cst_9 {dimension_numbers = #tpu.dot_dimension_numbers<[1], [0], [0], [1], [0, 0, 1, 1], [], []>} : vector<8x32xf32>, vector<32x32xf32>, vector<8x32xf32> -> vector<8x32xf32>
    %c0_10 = arith.constant 0 : index
    %c0_11 = arith.constant 0 : index
    %13 = vector.load %arg5[%c0_10, %c0_11] : memref<1x32xf32, #tpu.memory_space<vmem>>, vector<1x32xf32>
    %14 = vector.broadcast %13 : vector<1x32xf32> to vector<8x32xf32>
    %15 = arith.addf %12, %14 : vector<8x32xf32>
    %cst_12 = arith.constant 0.000000e+00 : f32
    %16 = vector.broadcast %cst_12 : f32 to vector<8x32xf32>
    %17 = arith.cmpf ogt, %15, %16 : vector<8x32xf32>
    %cst_13 = arith.constant 0.00999999977 : f32
    %18 = vector.broadcast %cst_13 : f32 to vector<8x32xf32>
    %19 = arith.mulf %18, %15 : vector<8x32xf32>
    %20 = arith.select %17, %15, %19 : vector<8x32xi1>, vector<8x32xf32>
    %c0_14 = arith.constant 0 : index
    %c0_15 = arith.constant 0 : index
    %21 = vector.load %arg6[%c0_14, %c0_15] : memref<32x128xf32, #tpu.memory_space<vmem>>, vector<32x128xf32>
    %cst_16 = arith.constant dense<0.000000e+00> : vector<8x128xf32>
    %22 = tpu.matmul %20, %21, %cst_16 {dimension_numbers = #tpu.dot_dimension_numbers<[1], [0], [0], [1], [0, 0, 1, 1], [], []>} : vector<8x32xf32>, vector<32x128xf32>, vector<8x128xf32> -> vector<8x128xf32>
    %c0_17 = arith.constant 0 : index
    %c0_18 = arith.constant 0 : index
    %23 = vector.load %arg7[%c0_17, %c0_18] : memref<1x128xf32, #tpu.memory_space<vmem>>, vector<1x128xf32>
    %24 = vector.broadcast %23 : vector<1x128xf32> to vector<8x128xf32>
    %25 = arith.addf %22, %24 : vector<8x128xf32>
    %cst_19 = arith.constant dense<0xFF800000> : vector<8xf32>
    %26 = vector.multi_reduction <maximumf>, %25, %cst_19 [1] : vector<8x128xf32> to vector<8xf32>
    %27 = vector.shape_cast %26 : vector<8xf32> to vector<8x1xf32>
    %28 = vector.broadcast %27 : vector<8x1xf32> to vector<8x128xf32>
    %29 = arith.subf %25, %28 : vector<8x128xf32>
    %30 = math.exp %29 : vector<8x128xf32>
    %cst_20 = arith.constant dense<0.000000e+00> : vector<8xf32>
    %31 = vector.multi_reduction <add>, %30, %cst_20 [1] : vector<8x128xf32> to vector<8xf32>
    %32 = vector.shape_cast %31 : vector<8xf32> to vector<8x1xf32>
    %33 = tpu.reciprocal %32 {approx = true} : vector<8x1xf32> -> vector<8x1xf32>
    %34 = vector.broadcast %33 : vector<8x1xf32> to vector<8x128xf32>
    %35 = arith.mulf %30, %34 : vector<8x128xf32>
    %c0_21 = arith.constant 0 : index
    %c0_22 = arith.constant 0 : index
    %36 = vector.load %arg8[%c0_21, %c0_22] : memref<8x128xf32, #tpu.memory_space<vmem>>, vector<8x128xf32>
    tpu.vector_store %arg8[%c0_21, %c0_22], %35 {strides = array<i32>} : memref<8x128xf32, #tpu.memory_space<vmem>>, vector<8x128xf32>,
    return
  }
  func.func @transform_0(%arg0: i32) -> (i32, i32) {
    %c0_i32 = arith.constant 0 : i32
    %c0_i32_0 = arith.constant 0 : i32
    return %arg0, %c0_i32 : i32, i32
  }
  func.func @transform_1(%arg0: i32) -> (i32, i32) {
    %c0_i32 = arith.constant 0 : i32
    %c0_i32_0 = arith.constant 0 : i32
    %c0_i32_1 = arith.constant 0 : i32
    return %c0_i32, %c0_i32_0 : i32, i32
  }
  func.func @transform_2(%arg0: i32) -> (i32, i32) {
    %c0_i32 = arith.constant 0 : i32
    %c0_i32_0 = arith.constant 0 : i32
    %c0_i32_1 = arith.constant 0 : i32
    return %c0_i32, %c0_i32_0 : i32, i32
  }
  func.func @transform_3(%arg0: i32) -> (i32, i32) {
    %c0_i32 = arith.constant 0 : i32
    %c0_i32_0 = arith.constant 0 : i32
    %c0_i32_1 = arith.constant 0 : i32
    return %c0_i32, %c0_i32_0 : i32, i32
  }
  func.func @transform_4(%arg0: i32) -> (i32, i32) {
    %c0_i32 = arith.constant 0 : i32
    %c0_i32_0 = arith.constant 0 : i32
    %c0_i32_1 = arith.constant 0 : i32
    return %c0_i32, %c0_i32_0 : i32, i32
  }
  func.func @transform_5(%arg0: i32) -> (i32, i32) {
    %c0_i32 = arith.constant 0 : i32
    %c0_i32_0 = arith.constant 0 : i32
    %c0_i32_1 = arith.constant 0 : i32
    return %c0_i32, %c0_i32_0 : i32, i32
  }
  func.func @transform_6(%arg0: i32) -> (i32, i32) {
    %c0_i32 = arith.constant 0 : i32
    %c0_i32_0 = arith.constant 0 : i32
    %c0_i32_1 = arith.constant 0 : i32
    return %c0_i32, %c0_i32_0 : i32, i32
  }
  func.func @transform_7(%arg0: i32) -> (i32, i32) {
    %c0_i32 = arith.constant 0 : i32
    %c0_i32_0 = arith.constant 0 : i32
    return %arg0, %c0_i32 : i32, i32
  }
}

</mosaic_0001>

<llo_original>
// kernel: tpu_custom_call.1
$region0: #{tpu_custom_call.1}
  #allocation0 [shape = 'u32[]', space=smem, size = 0x4, offset = 0x4, fixed_abs, tag = 'smem constant byte address 0x4 - core index']
  #allocation1 [shape = 'u32[72,128]{1,0:T(1,128)}', space=vmem, size = 0x9000, scoped, tag = 'internal scratch']
  %s0 = inlined_call_operand.hbm [shape: f32[8,16], index: 0, kind: input, shape index: {}]
  %s1 = inlined_call_operand.hbm [shape: f32[16,32], index: 1, kind: input, shape index: {}]
  %s2 = inlined_call_operand.vmem [shape: f32[1,32], index: 2, kind: input, shape index: {}]
  %s3 = inlined_call_operand.hbm [shape: f32[32,32], index: 3, kind: input, shape index: {}]
  %s4 = inlined_call_operand.vmem [shape: f32[1,32], index: 4, kind: input, shape index: {}]
  %s5 = inlined_call_operand.hbm [shape: f32[32,128], index: 5, kind: input, shape index: {}]
  %s6 = inlined_call_operand.vmem [shape: f32[1,128], index: 6, kind: input, shape index: {}]
  %s7 = inlined_call_operand.hbm [shape: f32[8,128], index: 7, kind: output, shape index: {}]
  %s8 = sld [smem:[#allocation0]]
  $region54: #{tpu_custom_call.1} parent=0
    _
  %s10 = ssub.s32 1, %s8
  %s11 = scalar_select 0, %s10, %s8
  $region1: #{tpu_custom_call.1} parent=0
    #allocation2 [shape = 'u8[4096]{0}', space=vmem, size = 0x1000, scoped, tag = 'input window, operand 0, single buffered']
    #allocation3 [shape = 's32[1]{0}', space=sflag, size = 0x4, scoped, tag = 'scoped memory for tpu_custom_call.1']
    #allocation4 [shape = 's32[1]{0}', space=sflag, size = 0x4, scoped, tag = 'scoped memory for tpu_custom_call.1']
    #allocation5 [shape = 'u8[8192]{0}', space=vmem, size = 0x2000, scoped, tag = 'input window, operand 1, single buffered']
    #allocation6 [shape = 's32[1]{0}', space=sflag, size = 0x4, scoped, tag = 'scoped memory for tpu_custom_call.1']
    #allocation7 [shape = 'u8[16384]{0}', space=vmem, size = 0x4000, scoped, tag = 'input window, operand 3, single buffered']
    #allocation8 [shape = 'u8[16384]{0}', space=vmem, size = 0x4000, scoped, tag = 'input window, operand 5, single buffered']
    #allocation9 [shape = 's32[1]{0}', space=sflag, size = 0x4, scoped, tag = 'scoped memory for tpu_custom_call.1']
    #allocation10 [shape = 'u8[4096]{0}', space=vmem, size = 0x1000, scoped, tag = 'output window, operand 0, single buffered']
    %12 = vsyncpa [#allocation3], 0
    %13 = vsyncpa [#allocation6], 0
    %14 = vsyncpa [#allocation9], 0
    %15 = vsyncpa [#allocation4], 0
    // Predicated region
    $region2: #{tpu_custom_call.1} parent=1 // pred_check
      _
    $region3: #{tpu_custom_call.1} parent=1 // pred_check_branch
      %17 = sbr.rel (0) target = $region5
    $region4: #{tpu_custom_call.1} parent=1 // pred_region
      %19 = vsyncadd [#allocation3], 0
      %s21 = sshll.u32 %s0, 4
      %s22 = int_to_ptr.hbm [resolvable:$true] %s21
      %s23 = sshll.u32 [#allocation2], 4
      %s24 = int_to_ptr.vmem [resolvable:$true] %s23
      %26 = dma.hbm_to_vmem [thread:$0]  %s22, 128, %s24, [#allocation3]
    $region5: #{tpu_custom_call.1} parent=1 // pred_fallthru
      _
    // Predicated region
    $region6: #{tpu_custom_call.1} parent=1 // pred_check
      _
    $region7: #{tpu_custom_call.1} parent=1 // pred_check_branch
      %28 = sbr.rel (0) target = $region9
    $region8: #{tpu_custom_call.1} parent=1 // pred_region
      %30 = vsyncadd [#allocation6], 0
      %s31 = sshll.u32 %s1, 4
      %s32 = int_to_ptr.hbm [resolvable:$true] %s31
      %s33 = sshll.u32 [#allocation5], 4
      %s34 = int_to_ptr.vmem [resolvable:$true] %s33
      %39 = dma.hbm_to_vmem [thread:$0]  %s32, 256, %s34, [#allocation6], 128, 128, 8
    $region9: #{tpu_custom_call.1} parent=1 // pred_fallthru
      _
    // Predicated region
    $region10: #{tpu_custom_call.1} parent=1 // pred_check
      _
    $region11: #{tpu_custom_call.1} parent=1 // pred_check_branch
      %41 = sbr.rel (0) target = $region13
    $region12: #{tpu_custom_call.1} parent=1 // pred_region
      _
    $region13: #{tpu_custom_call.1} parent=1 // pred_fallthru
      _
    // Predicated region
    $region14: #{tpu_custom_call.1} parent=1 // pred_check
      _
    $region15: #{tpu_custom_call.1} parent=1 // pred_check_branch
      %43 = sbr.rel (0) target = $region17
    $region16: #{tpu_custom_call.1} parent=1 // pred_region
      %45 = vsyncadd [#allocation6], 0
      %s46 = sshll.u32 %s3, 4
      %s47 = int_to_ptr.hbm [resolvable:$true] %s46
      %s48 = sshll.u32 [#allocation7], 4
      %s49 = int_to_ptr.vmem [resolvable:$true] %s48
      %54 = dma.hbm_to_vmem [thread:$0]  %s47, 512, %s49, [#allocation6], 128, 128, 8
    $region17: #{tpu_custom_call.1} parent=1 // pred_fallthru
      _
    // Predicated region
    $region18: #{tpu_custom_call.1} parent=1 // pred_check
      _
    $region19: #{tpu_custom_call.1} parent=1 // pred_check_branch
      %56 = sbr.rel (0) target = $region21
    $region20: #{tpu_custom_call.1} parent=1 // pred_region
      _
    $region21: #{tpu_custom_call.1} parent=1 // pred_fallthru
      _
    // Predicated region
    $region22: #{tpu_custom_call.1} parent=1 // pred_check
      _
    $region23: #{tpu_custom_call.1} parent=1 // pred_check_branch
      %58 = sbr.rel (0) target = $region25
    $region24: #{tpu_custom_call.1} parent=1 // pred_region
      %60 = vsyncadd [#allocation9], 0
      %s61 = sshll.u32 %s5, 4
      %s62 = int_to_ptr.hbm [resolvable:$true] %s61
      %s63 = sshll.u32 [#allocation8], 4
      %s64 = int_to_ptr.vmem [resolvable:$true] %s63
      %69 = dma.hbm_to_vmem [thread:$0]  %s62, 512, %s64, [#allocation9], 128, 128, 8
    $region25: #{tpu_custom_call.1} parent=1 // pred_fallthru
      _
    // Predicated region
    $region26: #{tpu_custom_call.1} parent=1 // pred_check
      _
    $region27: #{tpu_custom_call.1} parent=1 // pred_check_branch
      %71 = sbr.rel (0) target = $region29
    $region28: #{tpu_custom_call.1} parent=1 // pred_region
      _
    $region29: #{tpu_custom_call.1} parent=1 // pred_fallthru
      _
    // Predicated region
    $region30: #{tpu_custom_call.1} parent=1 // pred_check
      _
    $region31: #{tpu_custom_call.1} parent=1 // pred_check_branch
      %73 = sbr.rel (0) target = $region33
    $region32: #{tpu_custom_call.1} parent=1 // pred_region
      %75 = dma.done [#allocation3], 128
    $region33: #{tpu_custom_call.1} parent=1 // pred_fallthru
      _
    // Predicated region
    $region34: #{tpu_custom_call.1} parent=1 // pred_check
      _
    $region35: #{tpu_custom_call.1} parent=1 // pred_check_branch
      %77 = sbr.rel (0) target = $region37
    $region36: #{tpu_custom_call.1} parent=1 // pred_region
      %79 = dma.done [#allocation6], 256
    $region37: #{tpu_custom_call.1} parent=1 // pred_fallthru
      _
    // Predicated region
    $region38: #{tpu_custom_call.1} parent=1 // pred_check
      _
    $region39: #{tpu_custom_call.1} parent=1 // pred_check_branch
      %81 = sbr.rel (0) target = $region41
    $region40: #{tpu_custom_call.1} parent=1 // pred_region
      %83 = dma.done [#allocation6], 512
    $region41: #{tpu_custom_call.1} parent=1 // pred_fallthru
      _
    // Predicated region
    $region42: #{tpu_custom_call.1} parent=1 // pred_check
      _
    $region43: #{tpu_custom_call.1} parent=1 // pred_check_branch
      %85 = sbr.rel (0) target = $region45
    $region44: #{tpu_custom_call.1} parent=1 // pred_region
      %87 = dma.done [#allocation9], 512
    $region45: #{tpu_custom_call.1} parent=1 // pred_fallthru
      _
    %v88 = vld [vmem:[#allocation2] sm:$0xff]
    %v89 = vld [vmem:[#allocation5] sm:$0xff]
    %v90 = vld [vmem:[#allocation5 + $0x8] sm:$0xff]
    %v91 = vld [vmem:[%s2] sm:$0x1]
    %v93 = vperm.slane %v91, 0
    %vm95 = vcmask 130048
    %v97 = vsel %vm95, %v88, 0
    %99 = vmatpush.msra.mxu0 0.0
    %100 = vmatpush.msra.mxu0 0.0
    %101 = vmatpush.msra.mxu0 0.0
    %102 = vmatpush.msra.mxu0 0.0
    %103 = vmatpush.msra.mxu0 0.0
    %104 = vmatpush.msra.mxu0 0.0
    %105 = vmatpush.msra.mxu0 0.0
    %106 = vmatpush.msra.mxu0 0.0
    %107 = vmatpush.msra.mxu0 0.0
    %108 = vmatpush.msra.mxu0 0.0
    %109 = vmatpush.msra.mxu0 0.0
    %110 = vmatpush.msra.mxu0 0.0
    %111 = vmatpush.msra.mxu0 0.0
    %112 = vmatpush.msra.mxu0 0.0
    %113 = vmatpush.msra.mxu0 %v90
    %114 = vmatpush.msra.mxu0 %v89
    %115 = vmatmul.f32.gmra.mxu0 %v97
    %v116 = vpop.f32.mrf.mxu0
    %v117 = vadd.f32 %v93, %v116
    %118 = vdwg.mxu0
    %vm119 = vcmp.gt.f32.partialorder %v117, 0.0
    %v120 = vmul.f32 %v117, 0.01
    %v121 = vsel %vm119, %v117, %v120
    %v122 = vld [vmem:[#allocation7] sm:$0xff]
    %v123 = vld [vmem:[#allocation7 + $0x8] sm:$0xff]
    %v124 = vld [vmem:[#allocation7 + $0x10] sm:$0xff]
    %v125 = vld [vmem:[#allocation7 + $0x18] sm:$0xff]
    %v126 = vld [vmem:[%s4] sm:$0x1]
    %v128 = vperm.slane %v126, 0
    %vm130 = vcmask 261120
    %v132 = vsel %vm130, %v121, 0
    %134 = vmatpush.msra.mxu0 0.0
    %135 = vmatpush.msra.mxu0 0.0
    %136 = vmatpush.msra.mxu0 0.0
    %137 = vmatpush.msra.mxu0 0.0
    %138 = vmatpush.msra.mxu0 0.0
    %139 = vmatpush.msra.mxu0 0.0
    %140 = vmatpush.msra.mxu0 0.0
    %141 = vmatpush.msra.mxu0 0.0
    %142 = vmatpush.msra.mxu0 0.0
    %143 = vmatpush.msra.mxu0 0.0
    %144 = vmatpush.msra.mxu0 0.0
    %145 = vmatpush.msra.mxu0 0.0
    %146 = vmatpush.msra.mxu0 %v125
    %147 = vmatpush.msra.mxu0 %v124
    %148 = vmatpush.msra.mxu0 %v123
    %149 = vmatpush.msra.mxu0 %v122
    %150 = vmatmul.f32.gmra.mxu0 %v132
    %v151 = vpop.f32.mrf.mxu0
    %v152 = vadd.f32 %v128, %v151
    %153 = vdwg.mxu0
    %vm154 = vcmp.gt.f32.partialorder %v152, 0.0
    %v155 = vmul.f32 %v152, 0.01
    %v156 = vsel %vm154, %v152, %v155
    %v157 = vld [vmem:[#allocation8] sm:$0xff]
    %v158 = vld [vmem:[#allocation8 + $0x8] sm:$0xff]
    %v159 = vld [vmem:[#allocation8 + $0x10] sm:$0xff]
    %v160 = vld [vmem:[#allocation8 + $0x18] sm:$0xff]
    %v161 = vld [vmem:[%s6] sm:$0x1]
    %v163 = vperm.slane %v161, 0
    %v166 = vsel %vm130, %v156, 0
    %168 = vmatpush.msra.mxu0 0.0
    %169 = vmatpush.msra.mxu0 0.0
    %170 = vmatpush.msra.mxu0 0.0
    %171 = vmatpush.msra.mxu0 0.0
    %172 = vmatpush.msra.mxu0 0.0
    %173 = vmatpush.msra.mxu0 0.0
    %174 = vmatpush.msra.mxu0 0.0
    %175 = vmatpush.msra.mxu0 0.0
    %176 = vmatpush.msra.mxu0 0.0
    %177 = vmatpush.msra.mxu0 0.0
    %178 = vmatpush.msra.mxu0 0.0
    %179 = vmatpush.msra.mxu0 0.0
    %180 = vmatpush.msra.mxu0 %v160
    %181 = vmatpush.msra.mxu0 %v159
    %182 = vmatpush.msra.mxu0 %v158
    %183 = vmatpush.msra.mxu0 %v157
    %184 = vmatmul.f32.gmra.mxu0 %v166
    %v185 = vpop.f32.mrf.mxu0
    %v186 = vadd.f32 %v163, %v185
    %187 = vdwg.mxu0
    %188 = vmax.xlane.f32.xlu0 %v186
    %v189 = vpop.xlane.xlu0 %188
    %v190 = vsub.f32 %v186, %v189
    %v191 = vmul.f32 %v190, 1.442695
    %v192 = vpow.pop %v191
    %193 = vadd.xlane.f32.xlu0 %v192
    %v194 = vpop.xlane.xlu0 %193
    %v195 = vrcp.pop %v194
    %v196 = vmul.f32 %v192, %v195
    %197 = vst [vmem:[#allocation10] sm:$0xff] %v196
    // Predicated region
    $region46: #{tpu_custom_call.1} parent=1 // pred_check
      _
    $region47: #{tpu_custom_call.1} parent=1 // pred_check_branch
      %199 = sbr.rel (0) target = $region49
    $region48: #{tpu_custom_call.1} parent=1 // pred_region
      %201 = vsyncadd [#allocation4], 0
      %s203 = sshll.u32 [#allocation10], 4
      %s204 = int_to_ptr.vmem [resolvable:$true] %s203
      %s205 = sshll.u32 %s7, 4
      %s206 = int_to_ptr.hbm [resolvable:$true] %s205
      %208 = dma.vmem_to_hbm [thread:$0]  %s204, 128, %s206, [#allocation4]
    $region49: #{tpu_custom_call.1} parent=1 // pred_fallthru
      _
    // Predicated region
    $region50: #{tpu_custom_call.1} parent=1 // pred_check
      _
    $region51: #{tpu_custom_call.1} parent=1 // pred_check_branch
      %210 = sbr.rel (0) target = $region53
    $region52: #{tpu_custom_call.1} parent=1 // pred_region
      %212 = dma.done [#allocation4], 128
    $region53: #{tpu_custom_call.1} parent=1 // pred_fallthru
      _
    %213 = vsyncpa [#allocation3], 1
    %214 = vsyncpa [#allocation6], 1
    %215 = vsyncpa [#allocation9], 1
    %216 = vsyncpa [#allocation4], 1

</llo_original>
